<compile_context>
chip_gen: v5e
topology: v5e:2x2
jax: 0.10.0
libtpu: 0.0.40
codegen_flags: <defaults>
</compile_context>

<pallas_src>
import functools

import numpy as np
import jax
import jax.numpy as jnp
from jax.experimental import pallas as pl
from jax.experimental.pallas import tpu as pltpu

LANE = 128     # lane-dense padded channel width
SUBLANE = 8    # f32 sublane tile


def _vmem():
    # Small problem: keep every operand fully resident in VMEM (no tiling grid).
    return pl.BlockSpec(memory_space=pltpu.MemorySpace.VMEM)


def _pad2(x, rows, cols):
    out = jnp.zeros((rows, cols), x.dtype)
    return out.at[: x.shape[0], : x.shape[1]].set(x)


def gin_fused_kernel(num_layers, num_graphs, nodes_per_graph, g_pad,
                     a_ref, x_ref,
                     w1s_ref, b1s_ref, w2s_ref, b2s_ref,
                     wm1_ref, bm1_ref, wm2_ref, bm2_ref,
                     o_ref):
    # A' = A + I already holds the eps=0 self term; bf16 is exact for the
    # small integer edge multiplicities.
    a = a_ref[...]                       # (N, N) bf16
    h = x_ref[...]                       # (N, 128) bf16, channels zero-padded

    for l in range(num_layers):          # static unroll over layers
        # GINConv aggregation: (I + A) @ h  — single-pass bf16 MXU, f32 acc.
        agg = jnp.dot(a, h, preferred_element_type=jnp.float32)
        # PyG MLP([c_in, hid, hid]):
        #   Linear -> BatchNorm(eval: identity) -> ReLU -> Dropout(eval) -> Linear
        z = jnp.dot(agg.astype(jnp.bfloat16), w1s_ref[l],
                    preferred_element_type=jnp.float32) + b1s_ref[l]
        z = jnp.maximum(z, 0.0)
        z = jnp.dot(z.astype(jnp.bfloat16), w2s_ref[l],
                    preferred_element_type=jnp.float32) + b2s_ref[l]
        # trailing .relu() from GIN.forward; keep h bf16 for the next aggregation.
        h = jnp.maximum(z, 0.0).astype(jnp.bfloat16)

    # global_add_pool as a VPU segment-sum over contiguous equal-size graphs
    # (f32 accumulation; sublane-aligned reshape since nodes_per_graph % 8 == 0).
    pooled = jnp.sum(
        h.astype(jnp.float32).reshape(num_graphs, nodes_per_graph, LANE), axis=1)
    if g_pad > num_graphs:               # static pad to a full (8, 128) tile
        pooled = jnp.concatenate(
            [pooled, jnp.zeros((g_pad - num_graphs, LANE), jnp.float32)], axis=0)

    # Readout MLP([hid, hid, out], norm=None): Linear -> ReLU -> Dropout(eval) -> Linear
    z = jnp.dot(pooled.astype(jnp.bfloat16), wm1_ref[...],
                preferred_element_type=jnp.float32) + bm1_ref[...]
    z = jnp.maximum(z, 0.0)
    o_ref[...] = jnp.dot(z.astype(jnp.bfloat16), wm2_ref[...],
                         preferred_element_type=jnp.float32) + bm2_ref[...]


def init_params(key, in_channels, hidden, out_channels, num_layers):
    """Deterministic synthetic parameters matching the module's shapes."""
    params = {"convs": [], "mlp": None}
    c_in = in_channels
    for _ in range(num_layers):
        key, k1, k2 = jax.random.split(key, 3)
        w1 = jax.random.normal(k1, (c_in, hidden), jnp.float32) / jnp.sqrt(float(c_in))
        b1 = jnp.zeros((1, hidden), jnp.float32)
        w2 = jax.random.normal(k2, (hidden, hidden), jnp.float32) / jnp.sqrt(float(hidden))
        b2 = jnp.zeros((1, hidden), jnp.float32)
        params["convs"].append((w1, b1, w2, b2))
        c_in = hidden
    key, k1, k2 = jax.random.split(key, 3)
    w1 = jax.random.normal(k1, (hidden, hidden), jnp.float32) / jnp.sqrt(float(hidden))
    b1 = jnp.zeros((1, hidden), jnp.float32)
    w2 = jax.random.normal(k2, (hidden, out_channels), jnp.float32) / jnp.sqrt(float(hidden))
    b2 = jnp.zeros((1, out_channels), jnp.float32)
    params["mlp"] = (w1, b1, w2, b2)
    return params


def prepare_inputs(params, x, edge_index, batch, num_graphs):
    """Host-side glue, done ONCE and reused across forward calls:
    densify A' = A + I (bf16, exact for small integer multiplicities),
    zero-pad activations / weights to 128 lanes, cast weights to bf16."""
    n = x.shape[0]
    nodes_per_graph = n // num_graphs
    expected = np.repeat(np.arange(num_graphs), nodes_per_graph)
    assert np.array_equal(np.asarray(batch), expected), \
        "segment-sum pooling assumes contiguous equal-size graphs"

    src, dst = edge_index[0], edge_index[1]
    a = jnp.zeros((n, n), jnp.float32).at[dst, src].add(1.0)
    a = (a + jnp.eye(n, dtype=jnp.float32)).astype(jnp.bfloat16)

    x_pad = _pad2(x, n, LANE).astype(jnp.bfloat16)
    w1s = jnp.stack([_pad2(w1, LANE, LANE) for (w1, _, _, _) in params["convs"]]).astype(jnp.bfloat16)
    b1s = jnp.stack([_pad2(b1, 1, LANE) for (_, b1, _, _) in params["convs"]])
    w2s = jnp.stack([_pad2(w2, LANE, LANE) for (_, _, w2, _) in params["convs"]]).astype(jnp.bfloat16)
    b2s = jnp.stack([_pad2(b2, 1, LANE) for (_, _, _, b2) in params["convs"]])
    wm1, bm1, wm2, bm2 = params["mlp"]
    wm1 = _pad2(wm1, LANE, LANE).astype(jnp.bfloat16)
    bm1 = _pad2(bm1, 1, LANE)
    wm2 = _pad2(wm2, LANE, LANE).astype(jnp.bfloat16)
    bm2 = _pad2(bm2, 1, LANE)
    return (a, x_pad, w1s, b1s, w2s, b2s, wm1, bm1, wm2, bm2), nodes_per_graph


def gin_forward_prepared(prep, num_layers, num_graphs, nodes_per_graph, out_channels):
    a = prep[0]
    n = a.shape[0]
    g_pad = max(SUBLANE, pl.cdiv(num_graphs, SUBLANE) * SUBLANE)

    flops = (2 * num_layers * (n * n * LANE + 2 * n * LANE * LANE)
             + 2 * 2 * g_pad * LANE * LANE)
    bytes_accessed = (sum(int(np.prod(t.shape)) * t.dtype.itemsize for t in prep)
                      + g_pad * LANE * 4)

    out_pad = pl.pallas_call(
        functools.partial(gin_fused_kernel, num_layers, num_graphs,
                          nodes_per_graph, g_pad),
        out_shape=jax.ShapeDtypeStruct((g_pad, LANE), jnp.float32),
        in_specs=[_vmem()] * 10,
        out_specs=_vmem(),
        cost_estimate=pl.CostEstimate(flops=flops, transcendentals=0,
                                      bytes_accessed=bytes_accessed),
    )(*prep)
    return out_pad[:num_graphs, :out_channels]


if __name__ == "__main__":
    N_PER_GRAPH, NUM_GRAPHS = 32, 2
    N = N_PER_GRAPH * NUM_GRAPHS
    IN_C, HID, OUT_C, NUM_LAYERS = 16, 32, 8, 3
    DROPOUT = 0.5  # no-op in eval-mode forward

    key = jax.random.PRNGKey(0)
    key, kx, ke = jax.random.split(key, 3)
    x = jax.random.normal(kx, (N, IN_C), jnp.float32)

    # Deterministic random within-graph edges.
    e_per_graph = 64
    srcs, dsts = [], []
    for g in range(NUM_GRAPHS):
        ke, k1, k2 = jax.random.split(ke, 3)
        srcs.append(jax.random.randint(k1, (e_per_graph,), 0, N_PER_GRAPH) + g * N_PER_GRAPH)
        dsts.append(jax.random.randint(k2, (e_per_graph,), 0, N_PER_GRAPH) + g * N_PER_GRAPH)
    edge_index = jnp.stack([jnp.concatenate(srcs), jnp.concatenate(dsts)], axis=0)
    batch = jnp.repeat(jnp.arange(NUM_GRAPHS), N_PER_GRAPH)

    params = init_params(jax.random.PRNGKey(1), IN_C, HID, OUT_C, NUM_LAYERS)

    # Build A', padded bf16 weights etc. once; repeated inference reuses them.
    prep, nodes_per_graph = prepare_inputs(params, x, edge_index, batch, NUM_GRAPHS)
    prep = jax.block_until_ready(prep)

    out = gin_forward_prepared(prep, NUM_LAYERS, NUM_GRAPHS, nodes_per_graph, OUT_C)
    jax.block_until_ready(out)
    assert out.shape == (NUM_GRAPHS, OUT_C), out.shape
    assert out.dtype == jnp.float32
    assert bool(jnp.all(jnp.isfinite(out)))
    print("KERNEL_OK")
</pallas_src>

<mosaic_0001>
module attributes {stable_mosaic.version = 11 : i64} {
  func.func @gin_fused_kernel(%arg0: memref<64x64xbf16, #tpu.memory_space<vmem>>, %arg1: memref<64x128xbf16, #tpu.memory_space<vmem>>, %arg2: memref<3x128x128xbf16, #tpu.memory_space<vmem>>, %arg3: memref<3x1x128xf32, #tpu.memory_space<vmem>>, %arg4: memref<3x128x128xbf16, #tpu.memory_space<vmem>>, %arg5: memref<3x1x128xf32, #tpu.memory_space<vmem>>, %arg6: memref<128x128xbf16, #tpu.memory_space<vmem>>, %arg7: memref<1x128xf32, #tpu.memory_space<vmem>>, %arg8: memref<128x128xbf16, #tpu.memory_space<vmem>>, %arg9: memref<1x128xf32, #tpu.memory_space<vmem>>, %arg10: memref<8x128xf32, #tpu.memory_space<vmem>>) attributes {dimension_semantics = [], scalar_prefetch = 0 : i64, scratch_operands = 0 : i64, tpu.core_type = #tpu.core_type<tc>} {
    %c0 = arith.constant 0 : index
    %c0_0 = arith.constant 0 : index
    %0 = vector.load %arg0[%c0, %c0_0] : memref<64x64xbf16, #tpu.memory_space<vmem>>, vector<64x64xbf16>
    %c0_1 = arith.constant 0 : index
    %c0_2 = arith.constant 0 : index
    %1 = vector.load %arg1[%c0_1, %c0_2] : memref<64x128xbf16, #tpu.memory_space<vmem>>, vector<64x128xbf16>
    %cst = arith.constant dense<0.000000e+00> : vector<64x128xf32>
    %2 = tpu.matmul %0, %1, %cst {dimension_numbers = #tpu.dot_dimension_numbers<[1], [0], [0], [1], [0, 0, 1, 1], [], []>} : vector<64x64xbf16>, vector<64x128xbf16>, vector<64x128xf32> -> vector<64x128xf32>
    %3 = arith.truncf %2 : vector<64x128xf32> to vector<64x128xbf16>
    %c0_3 = arith.constant 0 : index
    %c0_4 = arith.constant 0 : index
    %c0_5 = arith.constant 0 : index
    %4 = vector.load %arg2[%c0_3, %c0_4, %c0_5] : memref<3x128x128xbf16, #tpu.memory_space<vmem>>, vector<1x128x128xbf16>
    %5 = vector.shape_cast %4 : vector<1x128x128xbf16> to vector<128x128xbf16>
    %cst_6 = arith.constant dense<0.000000e+00> : vector<64x128xf32>
    %6 = tpu.matmul %3, %5, %cst_6 {dimension_numbers = #tpu.dot_dimension_numbers<[1], [0], [0], [1], [0, 0, 1, 1], [], []>} : vector<64x128xbf16>, vector<128x128xbf16>, vector<64x128xf32> -> vector<64x128xf32>
    %c0_7 = arith.constant 0 : index
    %c0_8 = arith.constant 0 : index
    %c0_9 = arith.constant 0 : index
    %7 = vector.load %arg3[%c0_7, %c0_8, %c0_9] : memref<3x1x128xf32, #tpu.memory_space<vmem>>, vector<1x1x128xf32>
    %8 = vector.shape_cast %7 : vector<1x1x128xf32> to vector<1x128xf32>
    %9 = vector.broadcast %8 : vector<1x128xf32> to vector<64x128xf32>
    %10 = arith.addf %6, %9 : vector<64x128xf32>
    %cst_10 = arith.constant 0.000000e+00 : f32
    %11 = vector.broadcast %cst_10 : f32 to vector<64x128xf32>
    %12 = arith.maximumf %10, %11 : vector<64x128xf32>
    %13 = arith.truncf %12 : vector<64x128xf32> to vector<64x128xbf16>
    %c0_11 = arith.constant 0 : index
    %c0_12 = arith.constant 0 : index
    %c0_13 = arith.constant 0 : index
    %14 = vector.load %arg4[%c0_11, %c0_12, %c0_13] : memref<3x128x128xbf16, #tpu.memory_space<vmem>>, vector<1x128x128xbf16>
    %15 = vector.shape_cast %14 : vector<1x128x128xbf16> to vector<128x128xbf16>
    %cst_14 = arith.constant dense<0.000000e+00> : vector<64x128xf32>
    %16 = tpu.matmul %13, %15, %cst_14 {dimension_numbers = #tpu.dot_dimension_numbers<[1], [0], [0], [1], [0, 0, 1, 1], [], []>} : vector<64x128xbf16>, vector<128x128xbf16>, vector<64x128xf32> -> vector<64x128xf32>
    %c0_15 = arith.constant 0 : index
    %c0_16 = arith.constant 0 : index
    %c0_17 = arith.constant 0 : index
    %17 = vector.load %arg5[%c0_15, %c0_16, %c0_17] : memref<3x1x128xf32, #tpu.memory_space<vmem>>, vector<1x1x128xf32>
    %18 = vector.shape_cast %17 : vector<1x1x128xf32> to vector<1x128xf32>
    %19 = vector.broadcast %18 : vector<1x128xf32> to vector<64x128xf32>
    %20 = arith.addf %16, %19 : vector<64x128xf32>
    %cst_18 = arith.constant 0.000000e+00 : f32
    %21 = vector.broadcast %cst_18 : f32 to vector<64x128xf32>
    %22 = arith.maximumf %20, %21 : vector<64x128xf32>
    %23 = arith.truncf %22 : vector<64x128xf32> to vector<64x128xbf16>
    %cst_19 = arith.constant dense<0.000000e+00> : vector<64x128xf32>
    %24 = tpu.matmul %0, %23, %cst_19 {dimension_numbers = #tpu.dot_dimension_numbers<[1], [0], [0], [1], [0, 0, 1, 1], [], []>} : vector<64x64xbf16>, vector<64x128xbf16>, vector<64x128xf32> -> vector<64x128xf32>
    %25 = arith.truncf %24 : vector<64x128xf32> to vector<64x128xbf16>
    %c1 = arith.constant 1 : index
    %c0_20 = arith.constant 0 : index
    %c0_21 = arith.constant 0 : index
    %26 = vector.load %arg2[%c1, %c0_20, %c0_21] : memref<3x128x128xbf16, #tpu.memory_space<vmem>>, vector<1x128x128xbf16>
    %27 = vector.shape_cast %26 : vector<1x128x128xbf16> to vector<128x128xbf16>
    %cst_22 = arith.constant dense<0.000000e+00> : vector<64x128xf32>
    %28 = tpu.matmul %25, %27, %cst_22 {dimension_numbers = #tpu.dot_dimension_numbers<[1], [0], [0], [1], [0, 0, 1, 1], [], []>} : vector<64x128xbf16>, vector<128x128xbf16>, vector<64x128xf32> -> vector<64x128xf32>
    %c1_23 = arith.constant 1 : index
    %c0_24 = arith.constant 0 : index
    %c0_25 = arith.constant 0 : index
    %29 = vector.load %arg3[%c1_23, %c0_24, %c0_25] : memref<3x1x128xf32, #tpu.memory_space<vmem>>, vector<1x1x128xf32>
    %30 = vector.shape_cast %29 : vector<1x1x128xf32> to vector<1x128xf32>
    %31 = vector.broadcast %30 : vector<1x128xf32> to vector<64x128xf32>
    %32 = arith.addf %28, %31 : vector<64x128xf32>
    %cst_26 = arith.constant 0.000000e+00 : f32
    %33 = vector.broadcast %cst_26 : f32 to vector<64x128xf32>
    %34 = arith.maximumf %32, %33 : vector<64x128xf32>
    %35 = arith.truncf %34 : vector<64x128xf32> to vector<64x128xbf16>
    %c1_27 = arith.constant 1 : index
    %c0_28 = arith.constant 0 : index
    %c0_29 = arith.constant 0 : index
    %36 = vector.load %arg4[%c1_27, %c0_28, %c0_29] : memref<3x128x128xbf16, #tpu.memory_space<vmem>>, vector<1x128x128xbf16>
    %37 = vector.shape_cast %36 : vector<1x128x128xbf16> to vector<128x128xbf16>
    %cst_30 = arith.constant dense<0.000000e+00> : vector<64x128xf32>
    %38 = tpu.matmul %35, %37, %cst_30 {dimension_numbers = #tpu.dot_dimension_numbers<[1], [0], [0], [1], [0, 0, 1, 1], [], []>} : vector<64x128xbf16>, vector<128x128xbf16>, vector<64x128xf32> -> vector<64x128xf32>
    %c1_31 = arith.constant 1 : index
    %c0_32 = arith.constant 0 : index
    %c0_33 = arith.constant 0 : index
    %39 = vector.load %arg5[%c1_31, %c0_32, %c0_33] : memref<3x1x128xf32, #tpu.memory_space<vmem>>, vector<1x1x128xf32>
    %40 = vector.shape_cast %39 : vector<1x1x128xf32> to vector<1x128xf32>
    %41 = vector.broadcast %40 : vector<1x128xf32> to vector<64x128xf32>
    %42 = arith.addf %38, %41 : vector<64x128xf32>
    %cst_34 = arith.constant 0.000000e+00 : f32
    %43 = vector.broadcast %cst_34 : f32 to vector<64x128xf32>
    %44 = arith.maximumf %42, %43 : vector<64x128xf32>
    %45 = arith.truncf %44 : vector<64x128xf32> to vector<64x128xbf16>
    %cst_35 = arith.constant dense<0.000000e+00> : vector<64x128xf32>
    %46 = tpu.matmul %0, %45, %cst_35 {dimension_numbers = #tpu.dot_dimension_numbers<[1], [0], [0], [1], [0, 0, 1, 1], [], []>} : vector<64x64xbf16>, vector<64x128xbf16>, vector<64x128xf32> -> vector<64x128xf32>
    %47 = arith.truncf %46 : vector<64x128xf32> to vector<64x128xbf16>
    %c2 = arith.constant 2 : index
    %c0_36 = arith.constant 0 : index
    %c0_37 = arith.constant 0 : index
    %48 = vector.load %arg2[%c2, %c0_36, %c0_37] : memref<3x128x128xbf16, #tpu.memory_space<vmem>>, vector<1x128x128xbf16>
    %49 = vector.shape_cast %48 : vector<1x128x128xbf16> to vector<128x128xbf16>
    %cst_38 = arith.constant dense<0.000000e+00> : vector<64x128xf32>
    %50 = tpu.matmul %47, %49, %cst_38 {dimension_numbers = #tpu.dot_dimension_numbers<[1], [0], [0], [1], [0, 0, 1, 1], [], []>} : vector<64x128xbf16>, vector<128x128xbf16>, vector<64x128xf32> -> vector<64x128xf32>
    %c2_39 = arith.constant 2 : index
    %c0_40 = arith.constant 0 : index
    %c0_41 = arith.constant 0 : index
    %51 = vector.load %arg3[%c2_39, %c0_40, %c0_41] : memref<3x1x128xf32, #tpu.memory_space<vmem>>, vector<1x1x128xf32>
    %52 = vector.shape_cast %51 : vector<1x1x128xf32> to vector<1x128xf32>
    %53 = vector.broadcast %52 : vector<1x128xf32> to vector<64x128xf32>
    %54 = arith.addf %50, %53 : vector<64x128xf32>
    %cst_42 = arith.constant 0.000000e+00 : f32
    %55 = vector.broadcast %cst_42 : f32 to vector<64x128xf32>
    %56 = arith.maximumf %54, %55 : vector<64x128xf32>
    %57 = arith.truncf %56 : vector<64x128xf32> to vector<64x128xbf16>
    %c2_43 = arith.constant 2 : index
    %c0_44 = arith.constant 0 : index
    %c0_45 = arith.constant 0 : index
    %58 = vector.load %arg4[%c2_43, %c0_44, %c0_45] : memref<3x128x128xbf16, #tpu.memory_space<vmem>>, vector<1x128x128xbf16>
    %59 = vector.shape_cast %58 : vector<1x128x128xbf16> to vector<128x128xbf16>
    %cst_46 = arith.constant dense<0.000000e+00> : vector<64x128xf32>
    %60 = tpu.matmul %57, %59, %cst_46 {dimension_numbers = #tpu.dot_dimension_numbers<[1], [0], [0], [1], [0, 0, 1, 1], [], []>} : vector<64x128xbf16>, vector<128x128xbf16>, vector<64x128xf32> -> vector<64x128xf32>
    %c2_47 = arith.constant 2 : index
    %c0_48 = arith.constant 0 : index
    %c0_49 = arith.constant 0 : index
    %61 = vector.load %arg5[%c2_47, %c0_48, %c0_49] : memref<3x1x128xf32, #tpu.memory_space<vmem>>, vector<1x1x128xf32>
    %62 = vector.shape_cast %61 : vector<1x1x128xf32> to vector<1x128xf32>
    %63 = vector.broadcast %62 : vector<1x128xf32> to vector<64x128xf32>
    %64 = arith.addf %60, %63 : vector<64x128xf32>
    %cst_50 = arith.constant 0.000000e+00 : f32
    %65 = vector.broadcast %cst_50 : f32 to vector<64x128xf32>
    %66 = arith.maximumf %64, %65 : vector<64x128xf32>
    %67 = arith.truncf %66 : vector<64x128xf32> to vector<64x128xbf16>
    %68 = arith.extf %67 : vector<64x128xbf16> to vector<64x128xf32>
    %69 = vector.shape_cast %68 : vector<64x128xf32> to vector<2x32x128xf32>
    %cst_51 = arith.constant dense<0.000000e+00> : vector<2x128xf32>
    %70 = vector.multi_reduction <add>, %69, %cst_51 [1] : vector<2x32x128xf32> to vector<2x128xf32>
    %cst_52 = arith.constant 0.000000e+00 : f32
    %71 = vector.broadcast %cst_52 : f32 to vector<6x128xf32>
    %72 = tpu.concatenate %70, %71 in 0 : vector<2x128xf32>, vector<6x128xf32> -> vector<8x128xf32>
    %73 = arith.truncf %72 : vector<8x128xf32> to vector<8x128xbf16>
    %c0_53 = arith.constant 0 : index
    %c0_54 = arith.constant 0 : index
    %74 = vector.load %arg6[%c0_53, %c0_54] : memref<128x128xbf16, #tpu.memory_space<vmem>>, vector<128x128xbf16>
    %cst_55 = arith.constant dense<0.000000e+00> : vector<8x128xf32>
    %75 = tpu.matmul %73, %74, %cst_55 {dimension_numbers = #tpu.dot_dimension_numbers<[1], [0], [0], [1], [0, 0, 1, 1], [], []>} : vector<8x128xbf16>, vector<128x128xbf16>, vector<8x128xf32> -> vector<8x128xf32>
    %c0_56 = arith.constant 0 : index
    %c0_57 = arith.constant 0 : index
    %76 = vector.load %arg7[%c0_56, %c0_57] : memref<1x128xf32, #tpu.memory_space<vmem>>, vector<1x128xf32>
    %77 = vector.broadcast %76 : vector<1x128xf32> to vector<8x128xf32>
    %78 = arith.addf %75, %77 : vector<8x128xf32>
    %cst_58 = arith.constant 0.000000e+00 : f32
    %79 = vector.broadcast %cst_58 : f32 to vector<8x128xf32>
    %80 = arith.maximumf %78, %79 : vector<8x128xf32>
    %81 = arith.truncf %80 : vector<8x128xf32> to vector<8x128xbf16>
    %c0_59 = arith.constant 0 : index
    %c0_60 = arith.constant 0 : index
    %82 = vector.load %arg8[%c0_59, %c0_60] : memref<128x128xbf16, #tpu.memory_space<vmem>>, vector<128x128xbf16>
    %cst_61 = arith.constant dense<0.000000e+00> : vector<8x128xf32>
    %83 = tpu.matmul %81, %82, %cst_61 {dimension_numbers = #tpu.dot_dimension_numbers<[1], [0], [0], [1], [0, 0, 1, 1], [], []>} : vector<8x128xbf16>, vector<128x128xbf16>, vector<8x128xf32> -> vector<8x128xf32>
    %c0_62 = arith.constant 0 : index
    %c0_63 = arith.constant 0 : index
    %84 = vector.load %arg9[%c0_62, %c0_63] : memref<1x128xf32, #tpu.memory_space<vmem>>, vector<1x128xf32>
    %85 = vector.broadcast %84 : vector<1x128xf32> to vector<8x128xf32>
    %86 = arith.addf %83, %85 : vector<8x128xf32>
    %c0_64 = arith.constant 0 : index
    %c0_65 = arith.constant 0 : index
    %87 = vector.load %arg10[%c0_64, %c0_65] : memref<8x128xf32, #tpu.memory_space<vmem>>, vector<8x128xf32>
    tpu.vector_store %arg10[%c0_64, %c0_65], %86 {strides = array<i32>} : memref<8x128xf32, #tpu.memory_space<vmem>>, vector<8x128xf32>,
    return
  }
}

</mosaic_0001>

<llo_original>
// kernel: tpu_custom_call.1
$region0: #{tpu_custom_call.1}
  #allocation0 [shape = 'u32[]', space=smem, size = 0x4, offset = 0x4, fixed_abs, tag = 'smem constant byte address 0x4 - core index']
  #allocation1 [shape = 'u32[72,128]{1,0:T(1,128)}', space=vmem, size = 0x9000, scoped, tag = 'internal scratch']
  %s0 = inlined_call_operand.hbm [shape: bf16[64,64], index: 0, kind: input, shape index: {}]
  %s1 = inlined_call_operand.hbm [shape: bf16[64,128], index: 1, kind: input, shape index: {}]
  %s2 = inlined_call_operand.hbm [shape: bf16[3,128,128], index: 2, kind: input, shape index: {}]
  %s3 = inlined_call_operand.hbm [shape: f32[3,1,128], index: 3, kind: input, shape index: {}]
  %s4 = inlined_call_operand.hbm [shape: bf16[3,128,128], index: 4, kind: input, shape index: {}]
  %s5 = inlined_call_operand.vmem [shape: f32[3,1,128], index: 5, kind: input, shape index: {}]
  %s6 = inlined_call_operand.hbm [shape: bf16[128,128], index: 6, kind: input, shape index: {}]
  %s7 = inlined_call_operand.vmem [shape: f32[1,128], index: 7, kind: input, shape index: {}]
  %s8 = inlined_call_operand.hbm [shape: bf16[128,128], index: 8, kind: input, shape index: {}]
  %s9 = inlined_call_operand.vmem [shape: f32[1,128], index: 9, kind: input, shape index: {}]
  %s10 = inlined_call_operand.hbm [shape: f32[8,128], index: 10, kind: output, shape index: {}]
  %s11 = sld [smem:[#allocation0]]
  $region78: #{tpu_custom_call.1} parent=0
    _
  %s13 = ssub.s32 1, %s11
  %s14 = scalar_select 0, %s13, %s11
  $region1: #{tpu_custom_call.1} parent=0
    #allocation2 [shape = 'u8[16384]{0}', space=vmem, size = 0x4000, scoped, tag = 'input window, operand 0, single buffered']
    #allocation3 [shape = 's32[1]{0}', space=sflag, size = 0x4, scoped, tag = 'scoped memory for tpu_custom_call.1']
    #allocation4 [shape = 's32[1]{0}', space=sflag, size = 0x4, scoped, tag = 'scoped memory for tpu_custom_call.1']
    #allocation5 [shape = 'u8[16384]{0}', space=vmem, size = 0x4000, scoped, tag = 'input window, operand 1, single buffered']
    #allocation6 [shape = 's32[1]{0}', space=sflag, size = 0x4, scoped, tag = 'scoped memory for tpu_custom_call.1']
    #allocation7 [shape = 'u8[98304]{0}', space=vmem, size = 0x18000, scoped, tag = 'input window, operand 2, single buffered']
    #allocation8 [shape = 'u8[1536]{0}', space=vmem, size = 0x800, scoped, tag = 'input window, operand 3, single buffered']
    #allocation9 [shape = 's32[1]{0}', space=sflag, size = 0x4, scoped, tag = 'scoped memory for tpu_custom_call.1']
    #allocation10 [shape = 'u8[98304]{0}', space=vmem, size = 0x18000, scoped, tag = 'input window, operand 4, single buffered']
    #allocation11 [shape = 'u8[32768]{0}', space=vmem, size = 0x8000, scoped, tag = 'input window, operand 6, single buffered']
    #allocation12 [shape = 's32[1]{0}', space=sflag, size = 0x4, scoped, tag = 'scoped memory for tpu_custom_call.1']
    #allocation13 [shape = 'u8[32768]{0}', space=vmem, size = 0x8000, scoped, tag = 'input window, operand 8, single buffered']
    #allocation14 [shape = 'u8[4096]{0}', space=vmem, size = 0x1000, scoped, tag = 'output window, operand 0, single buffered']
    %15 = vsyncpa [#allocation3], 0
    %16 = vsyncpa [#allocation6], 0
    %17 = vsyncpa [#allocation9], 0
    %18 = vsyncpa [#allocation12], 0
    %19 = vsyncpa [#allocation4], 0
    // Predicated region
    $region2: #{tpu_custom_call.1} parent=1 // pred_check
      _
    $region3: #{tpu_custom_call.1} parent=1 // pred_check_branch
      %21 = sbr.rel (0) target = $region5
    $region4: #{tpu_custom_call.1} parent=1 // pred_region
      %23 = vsyncadd [#allocation3], 0
      %s24 = sshll.u32 %s0, 4
      %s25 = int_to_ptr.hbm [resolvable:$true] %s24
      %s26 = sshll.u32 [#allocation2], 4
      %s27 = int_to_ptr.vmem [resolvable:$true] %s26
      %32 = dma.hbm_to_vmem [thread:$0]  %s25, 512, %s27, [#allocation3], 64, 64, 4
    $region5: #{tpu_custom_call.1} parent=1 // pred_fallthru
      _
    // Predicated region
    $region6: #{tpu_custom_call.1} parent=1 // pred_check
      _
    $region7: #{tpu_custom_call.1} parent=1 // pred_check_branch
      %34 = sbr.rel (0) target = $region9
    $region8: #{tpu_custom_call.1} parent=1 // pred_region
      %36 = vsyncadd [#allocation6], 0
      %s37 = sshll.u32 %s1, 4
      %s38 = int_to_ptr.hbm [resolvable:$true] %s37
      %s39 = sshll.u32 [#allocation5], 4
      %s40 = int_to_ptr.vmem [resolvable:$true] %s39
      %45 = dma.hbm_to_vmem [thread:$0]  %s38, 512, %s40, [#allocation6], 64, 64, 4
    $region9: #{tpu_custom_call.1} parent=1 // pred_fallthru
      _
    // Predicated region
    $region10: #{tpu_custom_call.1} parent=1 // pred_check
      _
    $region11: #{tpu_custom_call.1} parent=1 // pred_check_branch
      %47 = sbr.rel (0) target = $region13
    $region12: #{tpu_custom_call.1} parent=1 // pred_region
      %49 = vsyncadd [#allocation6], 0
      %s50 = sshll.u32 %s2, 4
      %s51 = int_to_ptr.hbm [resolvable:$true] %s50
      %s52 = sshll.u32 [#allocation7], 4
      %s53 = int_to_ptr.vmem [resolvable:$true] %s52
      %58 = dma.hbm_to_vmem [thread:$0]  %s51, 3072, %s53, [#allocation6], 64, 64, 4
    $region13: #{tpu_custom_call.1} parent=1 // pred_fallthru
      _
    // Predicated region
    $region14: #{tpu_custom_call.1} parent=1 // pred_check
      _
    $region15: #{tpu_custom_call.1} parent=1 // pred_check_branch
      %60 = sbr.rel (0) target = $region17
    $region16: #{tpu_custom_call.1} parent=1 // pred_region
      %62 = vsyncadd [#allocation9], 0
      %s63 = sshll.u32 %s3, 4
      %s64 = int_to_ptr.hbm [resolvable:$true] %s63
      %s65 = sshll.u32 [#allocation8], 4
      %s66 = int_to_ptr.vmem [resolvable:$true] %s65
      %71 = dma.hbm_to_vmem [thread:$0]  %s64, 48, %s66, [#allocation9], 16, 16, 1
    $region17: #{tpu_custom_call.1} parent=1 // pred_fallthru
      _
    // Predicated region
    $region18: #{tpu_custom_call.1} parent=1 // pred_check
      _
    $region19: #{tpu_custom_call.1} parent=1 // pred_check_branch
      %73 = sbr.rel (0) target = $region21
    $region20: #{tpu_custom_call.1} parent=1 // pred_region
      %75 = vsyncadd [#allocation9], 0
      %s76 = sshll.u32 %s4, 4
      %s77 = int_to_ptr.hbm [resolvable:$true] %s76
      %s78 = sshll.u32 [#allocation10], 4
      %s79 = int_to_ptr.vmem [resolvable:$true] %s78
      %84 = dma.hbm_to_vmem [thread:$0]  %s77, 3072, %s79, [#allocation9], 64, 64, 4
    $region21: #{tpu_custom_call.1} parent=1 // pred_fallthru
      _
    // Predicated region
    $region22: #{tpu_custom_call.1} parent=1 // pred_check
      _
    $region23: #{tpu_custom_call.1} parent=1 // pred_check_branch
      %86 = sbr.rel (0) target = $region25
    $region24: #{tpu_custom_call.1} parent=1 // pred_region
      _
    $region25: #{tpu_custom_call.1} parent=1 // pred_fallthru
      _
    // Predicated region
    $region26: #{tpu_custom_call.1} parent=1 // pred_check
      _
    $region27: #{tpu_custom_call.1} parent=1 // pred_check_branch
      %88 = sbr.rel (0) target = $region29
    $region28: #{tpu_custom_call.1} parent=1 // pred_region
      %90 = vsyncadd [#allocation12], 0
      %s91 = sshll.u32 %s6, 4
      %s92 = int_to_ptr.hbm [resolvable:$true] %s91
      %s93 = sshll.u32 [#allocation11], 4
      %s94 = int_to_ptr.vmem [resolvable:$true] %s93
      %99 = dma.hbm_to_vmem [thread:$0]  %s92, 1024, %s94, [#allocation12], 64, 64, 4
    $region29: #{tpu_custom_call.1} parent=1 // pred_fallthru
      _
    // Predicated region
    $region30: #{tpu_custom_call.1} parent=1 // pred_check
      _
    $region31: #{tpu_custom_call.1} parent=1 // pred_check_branch
      %101 = sbr.rel (0) target = $region33
    $region32: #{tpu_custom_call.1} parent=1 // pred_region
      _
    $region33: #{tpu_custom_call.1} parent=1 // pred_fallthru
      _
    // Predicated region
    $region34: #{tpu_custom_call.1} parent=1 // pred_check
      _
    $region35: #{tpu_custom_call.1} parent=1 // pred_check_branch
      %103 = sbr.rel (0) target = $region37
    $region36: #{tpu_custom_call.1} parent=1 // pred_region
      %105 = vsyncadd [#allocation12], 0
      %s106 = sshll.u32 %s8, 4
      %s107 = int_to_ptr.hbm [resolvable:$true] %s106
      %s108 = sshll.u32 [#allocation13], 4
      %s109 = int_to_ptr.vmem [resolvable:$true] %s108
      %114 = dma.hbm_to_vmem [thread:$0]  %s107, 1024, %s109, [#allocation12], 64, 64, 4
    $region37: #{tpu_custom_call.1} parent=1 // pred_fallthru
      _
    // Predicated region
    $region38: #{tpu_custom_call.1} parent=1 // pred_check
      _
    $region39: #{tpu_custom_call.1} parent=1 // pred_check_branch
      %116 = sbr.rel (0) target = $region41
    $region40: #{tpu_custom_call.1} parent=1 // pred_region
      _
    $region41: #{tpu_custom_call.1} parent=1 // pred_fallthru
      _
    // Predicated region
    $region42: #{tpu_custom_call.1} parent=1 // pred_check
      _
    $region43: #{tpu_custom_call.1} parent=1 // pred_check_branch
      %118 = sbr.rel (0) target = $region45
    $region44: #{tpu_custom_call.1} parent=1 // pred_region
      %120 = dma.done [#allocation3], 512
    $region45: #{tpu_custom_call.1} parent=1 // pred_fallthru
      _
    // Predicated region
    $region46: #{tpu_custom_call.1} parent=1 // pred_check
      _
    $region47: #{tpu_custom_call.1} parent=1 // pred_check_branch
      %122 = sbr.rel (0) target = $region49
    $region48: #{tpu_custom_call.1} parent=1 // pred_region
      %124 = dma.done [#allocation6], 512
    $region49: #{tpu_custom_call.1} parent=1 // pred_fallthru
      _
    // Predicated region
    $region50: #{tpu_custom_call.1} parent=1 // pred_check
      _
    $region51: #{tpu_custom_call.1} parent=1 // pred_check_branch
      %126 = sbr.rel (0) target = $region53
    $region52: #{tpu_custom_call.1} parent=1 // pred_region
      %128 = dma.done [#allocation6], 3072
    $region53: #{tpu_custom_call.1} parent=1 // pred_fallthru
      _
    // Predicated region
    $region54: #{tpu_custom_call.1} parent=1 // pred_check
      _
    $region55: #{tpu_custom_call.1} parent=1 // pred_check_branch
      %130 = sbr.rel (0) target = $region57
    $region56: #{tpu_custom_call.1} parent=1 // pred_region
      %132 = dma.done [#allocation9], 48
    $region57: #{tpu_custom_call.1} parent=1 // pred_fallthru
      _
    // Predicated region
    $region58: #{tpu_custom_call.1} parent=1 // pred_check
      _
    $region59: #{tpu_custom_call.1} parent=1 // pred_check_branch
      %134 = sbr.rel (0) target = $region61
    $region60: #{tpu_custom_call.1} parent=1 // pred_region
      %136 = dma.done [#allocation9], 3072
    $region61: #{tpu_custom_call.1} parent=1 // pred_fallthru
      _
    // Predicated region
    $region62: #{tpu_custom_call.1} parent=1 // pred_check
      _
    $region63: #{tpu_custom_call.1} parent=1 // pred_check_branch
      %138 = sbr.rel (0) target = $region65
    $region64: #{tpu_custom_call.1} parent=1 // pred_region
      %140 = dma.done [#allocation12], 1024
    $region65: #{tpu_custom_call.1} parent=1 // pred_fallthru
      _
    // Predicated region
    $region66: #{tpu_custom_call.1} parent=1 // pred_check
      _
    $region67: #{tpu_custom_call.1} parent=1 // pred_check_branch
      %142 = sbr.rel (0) target = $region69
    $region68: #{tpu_custom_call.1} parent=1 // pred_region
      %144 = dma.done [#allocation12], 1024
    $region69: #{tpu_custom_call.1} parent=1 // pred_fallthru
      _
    %v146 = vld [vmem:[#allocation2] sm:$0xf]
    %v147 = vld [vmem:[#allocation2 + $0x4] sm:$0xf]
    %v148 = vld [vmem:[#allocation2 + $0x8] sm:$0xf]
    %v149 = vld [vmem:[#allocation2 + $0xc] sm:$0xf]
    %v150 = vld [vmem:[#allocation2 + $0x10] sm:$0xf]
    %v151 = vld [vmem:[#allocation2 + $0x14] sm:$0xf]
    %v152 = vld [vmem:[#allocation2 + $0x18] sm:$0xf]
    %v153 = vld [vmem:[#allocation2 + $0x1c] sm:$0xf]
    %v154 = vld [vmem:[#allocation5] sm:$0xf]
    %v155 = vld [vmem:[#allocation5 + $0x4] sm:$0xf]
    %v156 = vld [vmem:[#allocation5 + $0x8] sm:$0xf]
    %v157 = vld [vmem:[#allocation5 + $0xc] sm:$0xf]
    %v158 = vld [vmem:[#allocation5 + $0x10] sm:$0xf]
    %v159 = vld [vmem:[#allocation5 + $0x14] sm:$0xf]
    %v160 = vld [vmem:[#allocation5 + $0x18] sm:$0xf]
    %v161 = vld [vmem:[#allocation5 + $0x1c] sm:$0xf]
    %v170 = vunpack.c.l.b16 %v146
    %v171 = vunpack.c.l.b16 %v147
    %v172 = vunpack.c.l.b16 %v148
    %v173 = vunpack.c.l.b16 %v149
    %v174 = vunpack.c.l.b16 %v150
    %v175 = vunpack.c.l.b16 %v151
    %v176 = vunpack.c.l.b16 %v152
    %v177 = vunpack.c.l.b16 %v153
    %v178 = vpack.c.b16 %v171, %v170
    %v179 = vpack.c.b16 %v173, %v172
    %v180 = vpack.c.b16 %v175, %v174
    %v181 = vpack.c.b16 %v177, %v176
    %v190 = vunpack.c.l.b16 %v154
    %v191 = vunpack.c.l.b16 %v155
    %v192 = vunpack.c.l.b16 %v156
    %v193 = vunpack.c.l.b16 %v157
    %v194 = vunpack.c.l.b16 %v158
    %v195 = vunpack.c.l.b16 %v159
    %v196 = vunpack.c.l.b16 %v160
    %v197 = vunpack.c.l.b16 %v161
    %v198 = vpack.c.b16 %v191, %v190
    %v199 = vpack.c.b16 %v193, %v192
    %v200 = vpack.c.b16 %v195, %v194
    %v201 = vpack.c.b16 %v197, %v196
    %vm206 = vcmask 523264
    %v208 = vsel %vm206, %v178, 0
    %v211 = vsel %vm206, %v179, 0
    %v214 = vsel %vm206, %v180, 0
    %v217 = vsel %vm206, %v181, 0
    %219 = vmatpush.bf16.msra.mxu0 0
    %220 = vmatpush.bf16.msra.mxu0 0
    %221 = vmatpush.bf16.msra.mxu0 0
    %222 = vmatpush.bf16.msra.mxu0 0
    %223 = vmatpush.bf16.msra.mxu0 %v201
    %224 = vmatpush.bf16.msra.mxu0 %v200
    %225 = vmatpush.bf16.msra.mxu0 %v199
    %226 = vmatpush.bf16.msra.mxu0 %v198
    %227 = vmatmul.bf16.gmra.mxu0 %v208
    %v228 = vpop.f32.mrf.mxu0
    %v229 = vadd.f32 0.0, %v228
    %v230 = vpop.f32.mrf.mxu0
    %v231 = vadd.f32 0.0, %v230
    %232 = vmatmul.bf16.gmra.mxu0 %v211
    %v233 = vpop.f32.mrf.mxu0
    %v234 = vadd.f32 0.0, %v233
    %v235 = vpop.f32.mrf.mxu0
    %v236 = vadd.f32 0.0, %v235
    %237 = vmatmul.bf16.gmra.mxu0 %v214
    %v238 = vpop.f32.mrf.mxu0
    %v239 = vadd.f32 0.0, %v238
    %v240 = vpop.f32.mrf.mxu0
    %v241 = vadd.f32 0.0, %v240
    %242 = vmatmul.bf16.gmra.mxu0 %v217
    %v243 = vpop.f32.mrf.mxu0
    %v244 = vadd.f32 0.0, %v243
    %v245 = vpop.f32.mrf.mxu0
    %v246 = vadd.f32 0.0, %v245
    %247 = vdwg.mxu0
    %v248 = vpack.c.bf16 %v231, %v229
    %v249 = vpack.c.bf16 %v236, %v234
    %v250 = vpack.c.bf16 %v241, %v239
    %v251 = vpack.c.bf16 %v246, %v244
    %v252 = vld [vmem:[#allocation7] sm:$0xf]
    %v253 = vld [vmem:[#allocation7 + $0x4] sm:$0xf]
    %v254 = vld [vmem:[#allocation7 + $0x8] sm:$0xf]
    %v255 = vld [vmem:[#allocation7 + $0xc] sm:$0xf]
    %v256 = vld [vmem:[#allocation7 + $0x10] sm:$0xf]
    %v257 = vld [vmem:[#allocation7 + $0x14] sm:$0xf]
    %v258 = vld [vmem:[#allocation7 + $0x18] sm:$0xf]
    %v259 = vld [vmem:[#allocation7 + $0x1c] sm:$0xf]
    %v260 = vld [vmem:[#allocation7 + $0x20] sm:$0xf]
    %v261 = vld [vmem:[#allocation7 + $0x24] sm:$0xf]
    %v262 = vld [vmem:[#allocation7 + $0x28] sm:$0xf]
    %v263 = vld [vmem:[#allocation7 + $0x2c] sm:$0xf]
    %v264 = vld [vmem:[#allocation7 + $0x30] sm:$0xf]
    %v265 = vld [vmem:[#allocation7 + $0x34] sm:$0xf]
    %v266 = vld [vmem:[#allocation7 + $0x38] sm:$0xf]
    %v267 = vld [vmem:[#allocation7 + $0x3c] sm:$0xf]
    %v268 = vld [vmem:[#allocation8] sm:$0x1]
    %v270 = vperm.slane %v268, 0
    %v288 = vunpack.c.l.b16 %v252
    %v289 = vunpack.c.l.b16 %v253
    %v290 = vunpack.c.l.b16 %v254
    %v291 = vunpack.c.l.b16 %v255
    %v292 = vunpack.c.l.b16 %v256
    %v293 = vunpack.c.l.b16 %v257
    %v294 = vunpack.c.l.b16 %v258
    %v295 = vunpack.c.l.b16 %v259
    %v296 = vunpack.c.l.b16 %v260
    %v297 = vunpack.c.l.b16 %v261
    %v298 = vunpack.c.l.b16 %v262
    %v299 = vunpack.c.l.b16 %v263
    %v300 = vunpack.c.l.b16 %v264
    %v301 = vunpack.c.l.b16 %v265
    %v302 = vunpack.c.l.b16 %v266
    %v303 = vunpack.c.l.b16 %v267
    %v304 = vpack.c.b16 %v289, %v288
    %v305 = vpack.c.b16 %v291, %v290
    %v306 = vpack.c.b16 %v293, %v292
    %v307 = vpack.c.b16 %v295, %v294
    %v308 = vpack.c.b16 %v297, %v296
    %v309 = vpack.c.b16 %v299, %v298
    %v310 = vpack.c.b16 %v301, %v300
    %v311 = vpack.c.b16 %v303, %v302
    %320 = vmatpush.bf16.msra.mxu0 %v311
    %321 = vmatpush.bf16.msra.mxu0 %v310
    %322 = vmatpush.bf16.msra.mxu0 %v309
    %323 = vmatpush.bf16.msra.mxu0 %v308
    %324 = vmatpush.bf16.msra.mxu0 %v307
    %325 = vmatpush.bf16.msra.mxu0 %v306
    %326 = vmatpush.bf16.msra.mxu0 %v305
    %327 = vmatpush.bf16.msra.mxu0 %v304
    %328 = vmatmul.bf16.gmra.mxu0 %v248
    %v329 = vpop.f32.mrf.mxu0
    %v330 = vadd.f32 %v270, %v329
    %v331 = vpop.f32.mrf.mxu0
    %v332 = vadd.f32 %v270, %v331
    %333 = vmatmul.bf16.gmra.mxu0 %v249
    %v334 = vpop.f32.mrf.mxu0
    %v335 = vadd.f32 %v270, %v334
    %v336 = vpop.f32.mrf.mxu0
    %v337 = vadd.f32 %v270, %v336
    %338 = vmatmul.bf16.gmra.mxu0 %v250
    %v339 = vpop.f32.mrf.mxu0
    %v340 = vadd.f32 %v270, %v339
    %v341 = vpop.f32.mrf.mxu0
    %v342 = vadd.f32 %v270, %v341
    %343 = vmatmul.bf16.gmra.mxu0 %v251
    %v344 = vpop.f32.mrf.mxu0
    %v345 = vadd.f32 %v270, %v344
    %v346 = vpop.f32.mrf.mxu0
    %v347 = vadd.f32 %v270, %v346
    %348 = vdwg.mxu0
    %v349 = vmax.f32 %v330, 0.0
    %v350 = vmax.f32 %v332, 0.0
    %v351 = vmax.f32 %v335, 0.0
    %v352 = vmax.f32 %v337, 0.0
    %v353 = vmax.f32 %v340, 0.0
    %v354 = vmax.f32 %v342, 0.0
    %v355 = vmax.f32 %v345, 0.0
    %v356 = vmax.f32 %v347, 0.0
    %v357 = vpack.c.bf16 %v350, %v349
    %v358 = vpack.c.bf16 %v352, %v351
    %v359 = vpack.c.bf16 %v354, %v353
    %v360 = vpack.c.bf16 %v356, %v355
    %v361 = vld [vmem:[#allocation10] sm:$0xf]
    %v362 = vld [vmem:[#allocation10 + $0x4] sm:$0xf]
    %v363 = vld [vmem:[#allocation10 + $0x8] sm:$0xf]
    %v364 = vld [vmem:[#allocation10 + $0xc] sm:$0xf]
    %v365 = vld [vmem:[#allocation10 + $0x10] sm:$0xf]
    %v366 = vld [vmem:[#allocation10 + $0x14] sm:$0xf]
    %v367 = vld [vmem:[#allocation10 + $0x18] sm:$0xf]
    %v368 = vld [vmem:[#allocation10 + $0x1c] sm:$0xf]
    %v369 = vld [vmem:[#allocation10 + $0x20] sm:$0xf]
    %v370 = vld [vmem:[#allocation10 + $0x24] sm:$0xf]
    %v371 = vld [vmem:[#allocation10 + $0x28] sm:$0xf]
    %v372 = vld [vmem:[#allocation10 + $0x2c] sm:$0xf]
    %v373 = vld [vmem:[#allocation10 + $0x30] sm:$0xf]
    %v374 = vld [vmem:[#allocation10 + $0x34] sm:$0xf]
    %v375 = vld [vmem:[#allocation10 + $0x38] sm:$0xf]
    %v376 = vld [vmem:[#allocation10 + $0x3c] sm:$0xf]
    %v377 = vld [vmem:[%s5] sm:$0x1]
    %v379 = vperm.slane %v377, 0
    %v397 = vunpack.c.l.b16 %v361
    %v398 = vunpack.c.l.b16 %v362
    %v399 = vunpack.c.l.b16 %v363
    %v400 = vunpack.c.l.b16 %v364
    %v401 = vunpack.c.l.b16 %v365
    %v402 = vunpack.c.l.b16 %v366
    %v403 = vunpack.c.l.b16 %v367
    %v404 = vunpack.c.l.b16 %v368
    %v405 = vunpack.c.l.b16 %v369
    %v406 = vunpack.c.l.b16 %v370
    %v407 = vunpack.c.l.b16 %v371
    %v408 = vunpack.c.l.b16 %v372
    %v409 = vunpack.c.l.b16 %v373
    %v410 = vunpack.c.l.b16 %v374
    %v411 = vunpack.c.l.b16 %v375
    %v412 = vunpack.c.l.b16 %v376
    %v413 = vpack.c.b16 %v398, %v397
    %v414 = vpack.c.b16 %v400, %v399
    %v415 = vpack.c.b16 %v402, %v401
    %v416 = vpack.c.b16 %v404, %v403
    %v417 = vpack.c.b16 %v406, %v405
    %v418 = vpack.c.b16 %v408, %v407
    %v419 = vpack.c.b16 %v410, %v409
    %v420 = vpack.c.b16 %v412, %v411
    %429 = vmatpush.bf16.msra.mxu0 %v420
    %430 = vmatpush.bf16.msra.mxu0 %v419
    %431 = vmatpush.bf16.msra.mxu0 %v418
    %432 = vmatpush.bf16.msra.mxu0 %v417
    %433 = vmatpush.bf16.msra.mxu0 %v416
    %434 = vmatpush.bf16.msra.mxu0 %v415
    %435 = vmatpush.bf16.msra.mxu0 %v414
    %436 = vmatpush.bf16.msra.mxu0 %v413
    %437 = vmatmul.bf16.gmra.mxu0 %v357
    %v438 = vpop.f32.mrf.mxu0
    %v439 = vadd.f32 %v379, %v438
    %v440 = vpop.f32.mrf.mxu0
    %v441 = vadd.f32 %v379, %v440
    %442 = vmatmul.bf16.gmra.mxu0 %v358
    %v443 = vpop.f32.mrf.mxu0
    %v444 = vadd.f32 %v379, %v443
    %v445 = vpop.f32.mrf.mxu0
    %v446 = vadd.f32 %v379, %v445
    %447 = vmatmul.bf16.gmra.mxu0 %v359
    %v448 = vpop.f32.mrf.mxu0
    %v449 = vadd.f32 %v379, %v448
    %v450 = vpop.f32.mrf.mxu0
    %v451 = vadd.f32 %v379, %v450
    %452 = vmatmul.bf16.gmra.mxu0 %v360
    %v453 = vpop.f32.mrf.mxu0
    %v454 = vadd.f32 %v379, %v453
    %v455 = vpop.f32.mrf.mxu0
    %v456 = vadd.f32 %v379, %v455
    %457 = vdwg.mxu0
    %v458 = vmax.f32 %v439, 0.0
    %v459 = vmax.f32 %v441, 0.0
    %v460 = vmax.f32 %v444, 0.0
    %v461 = vmax.f32 %v446, 0.0
    %v462 = vmax.f32 %v449, 0.0
    %v463 = vmax.f32 %v451, 0.0
    %v464 = vmax.f32 %v454, 0.0
    %v465 = vmax.f32 %v456, 0.0
    %v466 = vpack.c.bf16 %v459, %v458
    %v467 = vpack.c.bf16 %v461, %v460
    %v468 = vpack.c.bf16 %v463, %v462
    %v469 = vpack.c.bf16 %v465, %v464
    %470 = vmatpush.bf16.msra.mxu0 0
    %471 = vmatpush.bf16.msra.mxu0 0
    %472 = vmatpush.bf16.msra.mxu0 0
    %473 = vmatpush.bf16.msra.mxu0 0
    %474 = vmatpush.bf16.msra.mxu0 %v469
    %475 = vmatpush.bf16.msra.mxu0 %v468
    %476 = vmatpush.bf16.msra.mxu0 %v467
    %477 = vmatpush.bf16.msra.mxu0 %v466
    %478 = vmatmul.bf16.gmra.mxu0 %v208
    %v479 = vpop.f32.mrf.mxu0
    %v480 = vadd.f32 0.0, %v479
    %v481 = vpop.f32.mrf.mxu0
    %v482 = vadd.f32 0.0, %v481
    %483 = vmatmul.bf16.gmra.mxu0 %v211
    %v484 = vpop.f32.mrf.mxu0
    %v485 = vadd.f32 0.0, %v484
    %v486 = vpop.f32.mrf.mxu0
    %v487 = vadd.f32 0.0, %v486
    %488 = vmatmul.bf16.gmra.mxu0 %v214
    %v489 = vpop.f32.mrf.mxu0
    %v490 = vadd.f32 0.0, %v489
    %v491 = vpop.f32.mrf.mxu0
    %v492 = vadd.f32 0.0, %v491
    %493 = vmatmul.bf16.gmra.mxu0 %v217
    %v494 = vpop.f32.mrf.mxu0
    %v495 = vadd.f32 0.0, %v494
    %v496 = vpop.f32.mrf.mxu0
    %v497 = vadd.f32 0.0, %v496
    %498 = vdwg.mxu0
    %v499 = vpack.c.bf16 %v482, %v480
    %v500 = vpack.c.bf16 %v487, %v485
    %v501 = vpack.c.bf16 %v492, %v490
    %v502 = vpack.c.bf16 %v497, %v495
    %s503 = scalar_lea.vmem [#allocation7], 64
    %v504 = vld [vmem:[%s503] sm:$0xf]
    %v505 = vld [vmem:[%s503 + $0x4] sm:$0xf]
    %v506 = vld [vmem:[%s503 + $0x8] sm:$0xf]
    %v507 = vld [vmem:[%s503 + $0xc] sm:$0xf]
    %v508 = vld [vmem:[%s503 + $0x10] sm:$0xf]
    %v509 = vld [vmem:[%s503 + $0x14] sm:$0xf]
    %v510 = vld [vmem:[%s503 + $0x18] sm:$0xf]
    %v511 = vld [vmem:[%s503 + $0x1c] sm:$0xf]
    %v512 = vld [vmem:[%s503 + $0x20] sm:$0xf]
    %v513 = vld [vmem:[%s503 + $0x24] sm:$0xf]
    %v514 = vld [vmem:[%s503 + $0x28] sm:$0xf]
    %v515 = vld [vmem:[%s503 + $0x2c] sm:$0xf]
    %v516 = vld [vmem:[%s503 + $0x30] sm:$0xf]
    %v517 = vld [vmem:[%s503 + $0x34] sm:$0xf]
    %v518 = vld [vmem:[%s503 + $0x38] sm:$0xf]
    %v519 = vld [vmem:[%s503 + $0x3c] sm:$0xf]
    %s520 = scalar_lea.vmem [#allocation8], 1
    %v521 = vld [vmem:[%s520] sm:$0x1]
    %v523 = vperm.slane %v521, 0
    %v541 = vunpack.c.l.b16 %v504
    %v542 = vunpack.c.l.b16 %v505
    %v543 = vunpack.c.l.b16 %v506
    %v544 = vunpack.c.l.b16 %v507
    %v545 = vunpack.c.l.b16 %v508
    %v546 = vunpack.c.l.b16 %v509
    %v547 = vunpack.c.l.b16 %v510
    %v548 = vunpack.c.l.b16 %v511
    %v549 = vunpack.c.l.b16 %v512
    %v550 = vunpack.c.l.b16 %v513
    %v551 = vunpack.c.l.b16 %v514
    %v552 = vunpack.c.l.b16 %v515
    %v553 = vunpack.c.l.b16 %v516
    %v554 = vunpack.c.l.b16 %v517
    %v555 = vunpack.c.l.b16 %v518
    %v556 = vunpack.c.l.b16 %v519
    %v557 = vpack.c.b16 %v542, %v541
    %v558 = vpack.c.b16 %v544, %v543
    %v559 = vpack.c.b16 %v546, %v545
    %v560 = vpack.c.b16 %v548, %v547
    %v561 = vpack.c.b16 %v550, %v549
    %v562 = vpack.c.b16 %v552, %v551
    %v563 = vpack.c.b16 %v554, %v553
    %v564 = vpack.c.b16 %v556, %v555
    %573 = vmatpush.bf16.msra.mxu0 %v564
    %574 = vmatpush.bf16.msra.mxu0 %v563
    %575 = vmatpush.bf16.msra.mxu0 %v562
    %576 = vmatpush.bf16.msra.mxu0 %v561
    %577 = vmatpush.bf16.msra.mxu0 %v560
    %578 = vmatpush.bf16.msra.mxu0 %v559
    %579 = vmatpush.bf16.msra.mxu0 %v558
    %580 = vmatpush.bf16.msra.mxu0 %v557
    %581 = vmatmul.bf16.gmra.mxu0 %v499
    %v582 = vpop.f32.mrf.mxu0
    %v583 = vadd.f32 %v523, %v582
    %v584 = vpop.f32.mrf.mxu0
    %v585 = vadd.f32 %v523, %v584
    %586 = vmatmul.bf16.gmra.mxu0 %v500
    %v587 = vpop.f32.mrf.mxu0
    %v588 = vadd.f32 %v523, %v587
    %v589 = vpop.f32.mrf.mxu0
    %v590 = vadd.f32 %v523, %v589
    %591 = vmatmul.bf16.gmra.mxu0 %v501
    %v592 = vpop.f32.mrf.mxu0
    %v593 = vadd.f32 %v523, %v592
    %v594 = vpop.f32.mrf.mxu0
    %v595 = vadd.f32 %v523, %v594
    %596 = vmatmul.bf16.gmra.mxu0 %v502
    %v597 = vpop.f32.mrf.mxu0
    %v598 = vadd.f32 %v523, %v597
    %v599 = vpop.f32.mrf.mxu0
    %v600 = vadd.f32 %v523, %v599
    %601 = vdwg.mxu0
    %v602 = vmax.f32 %v583, 0.0
    %v603 = vmax.f32 %v585, 0.0
    %v604 = vmax.f32 %v588, 0.0
    %v605 = vmax.f32 %v590, 0.0
    %v606 = vmax.f32 %v593, 0.0
    %v607 = vmax.f32 %v595, 0.0
    %v608 = vmax.f32 %v598, 0.0
    %v609 = vmax.f32 %v600, 0.0
    %v610 = vpack.c.bf16 %v603, %v602
    %v611 = vpack.c.bf16 %v605, %v604
    %v612 = vpack.c.bf16 %v607, %v606
    %v613 = vpack.c.bf16 %v609, %v608
    %s614 = scalar_lea.vmem [#allocation10], 64
    %v615 = vld [vmem:[%s614] sm:$0xf]
    %v616 = vld [vmem:[%s614 + $0x4] sm:$0xf]
    %v617 = vld [vmem:[%s614 + $0x8] sm:$0xf]
    %v618 = vld [vmem:[%s614 + $0xc] sm:$0xf]
    %v619 = vld [vmem:[%s614 + $0x10] sm:$0xf]
    %v620 = vld [vmem:[%s614 + $0x14] sm:$0xf]
    %v621 = vld [vmem:[%s614 + $0x18] sm:$0xf]
    %v622 = vld [vmem:[%s614 + $0x1c] sm:$0xf]
    %v623 = vld [vmem:[%s614 + $0x20] sm:$0xf]
    %v624 = vld [vmem:[%s614 + $0x24] sm:$0xf]
    %v625 = vld [vmem:[%s614 + $0x28] sm:$0xf]
    %v626 = vld [vmem:[%s614 + $0x2c] sm:$0xf]
    %v627 = vld [vmem:[%s614 + $0x30] sm:$0xf]
    %v628 = vld [vmem:[%s614 + $0x34] sm:$0xf]
    %v629 = vld [vmem:[%s614 + $0x38] sm:$0xf]
    %v630 = vld [vmem:[%s614 + $0x3c] sm:$0xf]
    %s631 = scalar_lea.vmem %s5, 1
    %v632 = vld [vmem:[%s631] sm:$0x1]
    %v634 = vperm.slane %v632, 0
    %v652 = vunpack.c.l.b16 %v615
    %v653 = vunpack.c.l.b16 %v616
    %v654 = vunpack.c.l.b16 %v617
    %v655 = vunpack.c.l.b16 %v618
    %v656 = vunpack.c.l.b16 %v619
    %v657 = vunpack.c.l.b16 %v620
    %v658 = vunpack.c.l.b16 %v621
    %v659 = vunpack.c.l.b16 %v622
    %v660 = vunpack.c.l.b16 %v623
    %v661 = vunpack.c.l.b16 %v624
    %v662 = vunpack.c.l.b16 %v625
    %v663 = vunpack.c.l.b16 %v626
    %v664 = vunpack.c.l.b16 %v627
    %v665 = vunpack.c.l.b16 %v628
    %v666 = vunpack.c.l.b16 %v629
    %v667 = vunpack.c.l.b16 %v630
    %v668 = vpack.c.b16 %v653, %v652
    %v669 = vpack.c.b16 %v655, %v654
    %v670 = vpack.c.b16 %v657, %v656
    %v671 = vpack.c.b16 %v659, %v658
    %v672 = vpack.c.b16 %v661, %v660
    %v673 = vpack.c.b16 %v663, %v662
    %v674 = vpack.c.b16 %v665, %v664
    %v675 = vpack.c.b16 %v667, %v666
    %684 = vmatpush.bf16.msra.mxu0 %v675
    %685 = vmatpush.bf16.msra.mxu0 %v674
    %686 = vmatpush.bf16.msra.mxu0 %v673
    %687 = vmatpush.bf16.msra.mxu0 %v672
    %688 = vmatpush.bf16.msra.mxu0 %v671
    %689 = vmatpush.bf16.msra.mxu0 %v670
    %690 = vmatpush.bf16.msra.mxu0 %v669
    %691 = vmatpush.bf16.msra.mxu0 %v668
    %692 = vmatmul.bf16.gmra.mxu0 %v610
    %v693 = vpop.f32.mrf.mxu0
    %v694 = vadd.f32 %v634, %v693
    %v695 = vpop.f32.mrf.mxu0
    %v696 = vadd.f32 %v634, %v695
    %697 = vmatmul.bf16.gmra.mxu0 %v611
    %v698 = vpop.f32.mrf.mxu0
    %v699 = vadd.f32 %v634, %v698
    %v700 = vpop.f32.mrf.mxu0
    %v701 = vadd.f32 %v634, %v700
    %702 = vmatmul.bf16.gmra.mxu0 %v612
    %v703 = vpop.f32.mrf.mxu0
    %v704 = vadd.f32 %v634, %v703
    %v705 = vpop.f32.mrf.mxu0
    %v706 = vadd.f32 %v634, %v705
    %707 = vmatmul.bf16.gmra.mxu0 %v613
    %v708 = vpop.f32.mrf.mxu0
    %v709 = vadd.f32 %v634, %v708
    %v710 = vpop.f32.mrf.mxu0
    %v711 = vadd.f32 %v634, %v710
    %712 = vdwg.mxu0
    %v713 = vmax.f32 %v694, 0.0
    %v714 = vmax.f32 %v696, 0.0
    %v715 = vmax.f32 %v699, 0.0
    %v716 = vmax.f32 %v701, 0.0
    %v717 = vmax.f32 %v704, 0.0
    %v718 = vmax.f32 %v706, 0.0
    %v719 = vmax.f32 %v709, 0.0
    %v720 = vmax.f32 %v711, 0.0
    %v721 = vpack.c.bf16 %v714, %v713
    %v722 = vpack.c.bf16 %v716, %v715
    %v723 = vpack.c.bf16 %v718, %v717
    %v724 = vpack.c.bf16 %v720, %v719
    %725 = vmatpush.bf16.msra.mxu0 0
    %726 = vmatpush.bf16.msra.mxu0 0
    %727 = vmatpush.bf16.msra.mxu0 0
    %728 = vmatpush.bf16.msra.mxu0 0
    %729 = vmatpush.bf16.msra.mxu0 %v724
    %730 = vmatpush.bf16.msra.mxu0 %v723
    %731 = vmatpush.bf16.msra.mxu0 %v722
    %732 = vmatpush.bf16.msra.mxu0 %v721
    %733 = vmatmul.bf16.gmra.mxu0 %v208
    %v734 = vpop.f32.mrf.mxu0
    %v735 = vadd.f32 0.0, %v734
    %v736 = vpop.f32.mrf.mxu0
    %v737 = vadd.f32 0.0, %v736
    %738 = vmatmul.bf16.gmra.mxu0 %v211
    %v739 = vpop.f32.mrf.mxu0
    %v740 = vadd.f32 0.0, %v739
    %v741 = vpop.f32.mrf.mxu0
    %v742 = vadd.f32 0.0, %v741
    %743 = vmatmul.bf16.gmra.mxu0 %v214
    %v744 = vpop.f32.mrf.mxu0
    %v745 = vadd.f32 0.0, %v744
    %v746 = vpop.f32.mrf.mxu0
    %v747 = vadd.f32 0.0, %v746
    %748 = vmatmul.bf16.gmra.mxu0 %v217
    %v749 = vpop.f32.mrf.mxu0
    %v750 = vadd.f32 0.0, %v749
    %v751 = vpop.f32.mrf.mxu0
    %v752 = vadd.f32 0.0, %v751
    %753 = vdwg.mxu0
    %v754 = vpack.c.bf16 %v737, %v735
    %v755 = vpack.c.bf16 %v742, %v740
    %v756 = vpack.c.bf16 %v747, %v745
    %v757 = vpack.c.bf16 %v752, %v750
    %s758 = scalar_lea.vmem [#allocation7], 128
    %v759 = vld [vmem:[%s758] sm:$0xf]
    %v760 = vld [vmem:[%s758 + $0x4] sm:$0xf]
    %v761 = vld [vmem:[%s758 + $0x8] sm:$0xf]
    %v762 = vld [vmem:[%s758 + $0xc] sm:$0xf]
    %v763 = vld [vmem:[%s758 + $0x10] sm:$0xf]
    %v764 = vld [vmem:[%s758 + $0x14] sm:$0xf]
    %v765 = vld [vmem:[%s758 + $0x18] sm:$0xf]
    %v766 = vld [vmem:[%s758 + $0x1c] sm:$0xf]
    %v767 = vld [vmem:[%s758 + $0x20] sm:$0xf]
    %v768 = vld [vmem:[%s758 + $0x24] sm:$0xf]
    %v769 = vld [vmem:[%s758 + $0x28] sm:$0xf]
    %v770 = vld [vmem:[%s758 + $0x2c] sm:$0xf]
    %v771 = vld [vmem:[%s758 + $0x30] sm:$0xf]
    %v772 = vld [vmem:[%s758 + $0x34] sm:$0xf]
    %v773 = vld [vmem:[%s758 + $0x38] sm:$0xf]
    %v774 = vld [vmem:[%s758 + $0x3c] sm:$0xf]
    %s775 = scalar_lea.vmem [#allocation8], 2
    %v776 = vld [vmem:[%s775] sm:$0x1]
    %v778 = vperm.slane %v776, 0
    %v796 = vunpack.c.l.b16 %v759
    %v797 = vunpack.c.l.b16 %v760
    %v798 = vunpack.c.l.b16 %v761
    %v799 = vunpack.c.l.b16 %v762
    %v800 = vunpack.c.l.b16 %v763
    %v801 = vunpack.c.l.b16 %v764
    %v802 = vunpack.c.l.b16 %v765
    %v803 = vunpack.c.l.b16 %v766
    %v804 = vunpack.c.l.b16 %v767
    %v805 = vunpack.c.l.b16 %v768
    %v806 = vunpack.c.l.b16 %v769
    %v807 = vunpack.c.l.b16 %v770
    %v808 = vunpack.c.l.b16 %v771
    %v809 = vunpack.c.l.b16 %v772
    %v810 = vunpack.c.l.b16 %v773
    %v811 = vunpack.c.l.b16 %v774
    %v812 = vpack.c.b16 %v797, %v796
    %v813 = vpack.c.b16 %v799, %v798
    %v814 = vpack.c.b16 %v801, %v800
    %v815 = vpack.c.b16 %v803, %v802
    %v816 = vpack.c.b16 %v805, %v804
    %v817 = vpack.c.b16 %v807, %v806
    %v818 = vpack.c.b16 %v809, %v808
    %v819 = vpack.c.b16 %v811, %v810
    %828 = vmatpush.bf16.msra.mxu0 %v819
    %829 = vmatpush.bf16.msra.mxu0 %v818
    %830 = vmatpush.bf16.msra.mxu0 %v817
    %831 = vmatpush.bf16.msra.mxu0 %v816
    %832 = vmatpush.bf16.msra.mxu0 %v815
    %833 = vmatpush.bf16.msra.mxu0 %v814
    %834 = vmatpush.bf16.msra.mxu0 %v813
    %835 = vmatpush.bf16.msra.mxu0 %v812
    %836 = vmatmul.bf16.gmra.mxu0 %v754
    %v837 = vpop.f32.mrf.mxu0
    %v838 = vadd.f32 %v778, %v837
    %v839 = vpop.f32.mrf.mxu0
    %v840 = vadd.f32 %v778, %v839
    %841 = vmatmul.bf16.gmra.mxu0 %v755
    %v842 = vpop.f32.mrf.mxu0
    %v843 = vadd.f32 %v778, %v842
    %v844 = vpop.f32.mrf.mxu0
    %v845 = vadd.f32 %v778, %v844
    %846 = vmatmul.bf16.gmra.mxu0 %v756
    %v847 = vpop.f32.mrf.mxu0
    %v848 = vadd.f32 %v778, %v847
    %v849 = vpop.f32.mrf.mxu0
    %v850 = vadd.f32 %v778, %v849
    %851 = vmatmul.bf16.gmra.mxu0 %v757
    %v852 = vpop.f32.mrf.mxu0
    %v853 = vadd.f32 %v778, %v852
    %v854 = vpop.f32.mrf.mxu0
    %v855 = vadd.f32 %v778, %v854
    %856 = vdwg.mxu0
    %v857 = vmax.f32 %v838, 0.0
    %v858 = vmax.f32 %v840, 0.0
    %v859 = vmax.f32 %v843, 0.0
    %v860 = vmax.f32 %v845, 0.0
    %v861 = vmax.f32 %v848, 0.0
    %v862 = vmax.f32 %v850, 0.0
    %v863 = vmax.f32 %v853, 0.0
    %v864 = vmax.f32 %v855, 0.0
    %v865 = vpack.c.bf16 %v858, %v857
    %v866 = vpack.c.bf16 %v860, %v859
    %v867 = vpack.c.bf16 %v862, %v861
    %v868 = vpack.c.bf16 %v864, %v863
    %s869 = scalar_lea.vmem [#allocation10], 128
    %v870 = vld [vmem:[%s869] sm:$0xf]
    %v871 = vld [vmem:[%s869 + $0x4] sm:$0xf]
    %v872 = vld [vmem:[%s869 + $0x8] sm:$0xf]
    %v873 = vld [vmem:[%s869 + $0xc] sm:$0xf]
    %v874 = vld [vmem:[%s869 + $0x10] sm:$0xf]
    %v875 = vld [vmem:[%s869 + $0x14] sm:$0xf]
    %v876 = vld [vmem:[%s869 + $0x18] sm:$0xf]
    %v877 = vld [vmem:[%s869 + $0x1c] sm:$0xf]
    %v878 = vld [vmem:[%s869 + $0x20] sm:$0xf]
    %v879 = vld [vmem:[%s869 + $0x24] sm:$0xf]
    %v880 = vld [vmem:[%s869 + $0x28] sm:$0xf]
    %v881 = vld [vmem:[%s869 + $0x2c] sm:$0xf]
    %v882 = vld [vmem:[%s869 + $0x30] sm:$0xf]
    %v883 = vld [vmem:[%s869 + $0x34] sm:$0xf]
    %v884 = vld [vmem:[%s869 + $0x38] sm:$0xf]
    %v885 = vld [vmem:[%s869 + $0x3c] sm:$0xf]
    %s886 = scalar_lea.vmem %s5, 2
    %v887 = vld [vmem:[%s886] sm:$0x1]
    %v889 = vperm.slane %v887, 0
    %v907 = vunpack.c.l.b16 %v870
    %v908 = vunpack.c.l.b16 %v871
    %v909 = vunpack.c.l.b16 %v872
    %v910 = vunpack.c.l.b16 %v873
    %v911 = vunpack.c.l.b16 %v874
    %v912 = vunpack.c.l.b16 %v875
    %v913 = vunpack.c.l.b16 %v876
    %v914 = vunpack.c.l.b16 %v877
    %v915 = vunpack.c.l.b16 %v878
    %v916 = vunpack.c.l.b16 %v879
    %v917 = vunpack.c.l.b16 %v880
    %v918 = vunpack.c.l.b16 %v881
    %v919 = vunpack.c.l.b16 %v882
    %v920 = vunpack.c.l.b16 %v883
    %v921 = vunpack.c.l.b16 %v884
    %v922 = vunpack.c.l.b16 %v885
    %v923 = vpack.c.b16 %v908, %v907
    %v924 = vpack.c.b16 %v910, %v909
    %v925 = vpack.c.b16 %v912, %v911
    %v926 = vpack.c.b16 %v914, %v913
    %v927 = vpack.c.b16 %v916, %v915
    %v928 = vpack.c.b16 %v918, %v917
    %v929 = vpack.c.b16 %v920, %v919
    %v930 = vpack.c.b16 %v922, %v921
    %939 = vmatpush.bf16.msra.mxu0 %v930
    %940 = vmatpush.bf16.msra.mxu0 %v929
    %941 = vmatpush.bf16.msra.mxu0 %v928
    %942 = vmatpush.bf16.msra.mxu0 %v927
    %943 = vmatpush.bf16.msra.mxu0 %v926
    %944 = vmatpush.bf16.msra.mxu0 %v925
    %945 = vmatpush.bf16.msra.mxu0 %v924
    %946 = vmatpush.bf16.msra.mxu0 %v923
    %947 = vmatmul.bf16.gmra.mxu0 %v865
    %v948 = vpop.f32.mrf.mxu0
    %v949 = vadd.f32 %v889, %v948
    %v950 = vpop.f32.mrf.mxu0
    %v951 = vadd.f32 %v889, %v950
    %952 = vmatmul.bf16.gmra.mxu0 %v866
    %v953 = vpop.f32.mrf.mxu0
    %v954 = vadd.f32 %v889, %v953
    %v955 = vpop.f32.mrf.mxu0
    %v956 = vadd.f32 %v889, %v955
    %957 = vmatmul.bf16.gmra.mxu0 %v867
    %v958 = vpop.f32.mrf.mxu0
    %v959 = vadd.f32 %v889, %v958
    %v960 = vpop.f32.mrf.mxu0
    %v961 = vadd.f32 %v889, %v960
    %962 = vmatmul.bf16.gmra.mxu0 %v868
    %v963 = vpop.f32.mrf.mxu0
    %v964 = vadd.f32 %v889, %v963
    %v965 = vpop.f32.mrf.mxu0
    %v966 = vadd.f32 %v889, %v965
    %967 = vdwg.mxu0
    %v968 = vmax.f32 %v949, 0.0
    %v969 = vmax.f32 %v951, 0.0
    %v970 = vmax.f32 %v954, 0.0
    %v971 = vmax.f32 %v956, 0.0
    %v972 = vmax.f32 %v959, 0.0
    %v973 = vmax.f32 %v961, 0.0
    %v974 = vmax.f32 %v964, 0.0
    %v975 = vmax.f32 %v966, 0.0
    %v976 = vpack.c.bf16 %v968, %v968
    %v977 = vpack.c.bf16 %v969, %v969
    %v978 = vpack.c.bf16 %v970, %v970
    %v979 = vpack.c.bf16 %v971, %v971
    %v980 = vpack.c.bf16 %v972, %v972
    %v981 = vpack.c.bf16 %v973, %v973
    %v982 = vpack.c.bf16 %v974, %v974
    %v983 = vpack.c.bf16 %v975, %v975
    %v984 = vunpack.c.l.bf16 %v976
    %v985 = vunpack.c.l.bf16 %v977
    %v986 = vunpack.c.l.bf16 %v978
    %v987 = vunpack.c.l.bf16 %v979
    %v988 = vunpack.c.l.bf16 %v980
    %v989 = vunpack.c.l.bf16 %v981
    %v990 = vunpack.c.l.bf16 %v982
    %v991 = vunpack.c.l.bf16 %v983
    %v992 = vadd.f32 %v984, %v985
    %v993 = vadd.f32 %v992, %v986
    %v994 = vadd.f32 %v993, %v987
    %v995 = vrot.slane %v994, 4
    %v996 = vadd.f32 %v994, %v995
    %v997 = vrot.slane %v996, 2
    %v998 = vadd.f32 %v996, %v997
    %v999 = vrot.slane %v998, 1
    %v1000 = vadd.f32 %v998, %v999
    %v1001 = vadd.f32 %v988, %v989
    %v1002 = vadd.f32 %v1001, %v990
    %v1003 = vadd.f32 %v1002, %v991
    %v1004 = vrot.slane %v1003, 4
    %v1005 = vadd.f32 %v1003, %v1004
    %v1006 = vrot.slane %v1005, 2
    %v1007 = vadd.f32 %v1005, %v1006
    %v1008 = vrot.slane %v1007, 1
    %v1009 = vadd.f32 %v1007, %v1008
    %vm1012 = vcmask 1041409
    %v1013 = vsel %vm1012, %v1009, %v1000
    %vm1015 = vcmask 1041408
    %v1016 = vsel %vm1015, %v1013, 0.0
    %v1017 = vpack.c.bf16 %v1016, %v1016
    %v1018 = vld [vmem:[#allocation11] sm:$0xf]
    %v1019 = vld [vmem:[#allocation11 + $0x4] sm:$0xf]
    %v1020 = vld [vmem:[#allocation11 + $0x8] sm:$0xf]
    %v1021 = vld [vmem:[#allocation11 + $0xc] sm:$0xf]
    %v1022 = vld [vmem:[#allocation11 + $0x10] sm:$0xf]
    %v1023 = vld [vmem:[#allocation11 + $0x14] sm:$0xf]
    %v1024 = vld [vmem:[#allocation11 + $0x18] sm:$0xf]
    %v1025 = vld [vmem:[#allocation11 + $0x1c] sm:$0xf]
    %v1026 = vld [vmem:[#allocation11 + $0x20] sm:$0xf]
    %v1027 = vld [vmem:[#allocation11 + $0x24] sm:$0xf]
    %v1028 = vld [vmem:[#allocation11 + $0x28] sm:$0xf]
    %v1029 = vld [vmem:[#allocation11 + $0x2c] sm:$0xf]
    %v1030 = vld [vmem:[#allocation11 + $0x30] sm:$0xf]
    %v1031 = vld [vmem:[#allocation11 + $0x34] sm:$0xf]
    %v1032 = vld [vmem:[#allocation11 + $0x38] sm:$0xf]
    %v1033 = vld [vmem:[#allocation11 + $0x3c] sm:$0xf]
    %v1034 = vld [vmem:[%s7] sm:$0x1]
    %v1036 = vperm.slane %v1034, 0
    %v1054 = vunpack.c.l.b16 %v1018
    %v1055 = vunpack.c.l.b16 %v1019
    %v1056 = vunpack.c.l.b16 %v1020
    %v1057 = vunpack.c.l.b16 %v1021
    %v1058 = vunpack.c.l.b16 %v1022
    %v1059 = vunpack.c.l.b16 %v1023
    %v1060 = vunpack.c.l.b16 %v1024
    %v1061 = vunpack.c.l.b16 %v1025
    %v1062 = vunpack.c.l.b16 %v1026
    %v1063 = vunpack.c.l.b16 %v1027
    %v1064 = vunpack.c.l.b16 %v1028
    %v1065 = vunpack.c.l.b16 %v1029
    %v1066 = vunpack.c.l.b16 %v1030
    %v1067 = vunpack.c.l.b16 %v1031
    %v1068 = vunpack.c.l.b16 %v1032
    %v1069 = vunpack.c.l.b16 %v1033
    %v1070 = vpack.c.b16 %v1055, %v1054
    %v1071 = vpack.c.b16 %v1057, %v1056
    %v1072 = vpack.c.b16 %v1059, %v1058
    %v1073 = vpack.c.b16 %v1061, %v1060
    %v1074 = vpack.c.b16 %v1063, %v1062
    %v1075 = vpack.c.b16 %v1065, %v1064
    %v1076 = vpack.c.b16 %v1067, %v1066
    %v1077 = vpack.c.b16 %v1069, %v1068
    %1086 = vmatpush.bf16.msra.mxu0 %v1077
    %1087 = vmatpush.bf16.msra.mxu0 %v1076
    %1088 = vmatpush.bf16.msra.mxu0 %v1075
    %1089 = vmatpush.bf16.msra.mxu0 %v1074
    %1090 = vmatpush.bf16.msra.mxu0 %v1073
    %1091 = vmatpush.bf16.msra.mxu0 %v1072
    %1092 = vmatpush.bf16.msra.mxu0 %v1071
    %1093 = vmatpush.bf16.msra.mxu0 %v1070
    %1094 = vmatmul.bf16.gmra.mxu0 %v1017
    %v1095 = vpop.f32.mrf.mxu0
    %v1096 = vadd.f32 %v1036, %v1095
    %v1097 = vpop.f32.mrf.mxu0
    %1098 = vdwg.mxu0
    %v1099 = vmax.f32 %v1096, 0.0
    %v1100 = vpack.c.bf16 %v1099, %v1099
    %v1101 = vld [vmem:[#allocation13] sm:$0xf]
    %v1102 = vld [vmem:[#allocation13 + $0x4] sm:$0xf]
    %v1103 = vld [vmem:[#allocation13 + $0x8] sm:$0xf]
    %v1104 = vld [vmem:[#allocation13 + $0xc] sm:$0xf]
    %v1105 = vld [vmem:[#allocation13 + $0x10] sm:$0xf]
    %v1106 = vld [vmem:[#allocation13 + $0x14] sm:$0xf]
    %v1107 = vld [vmem:[#allocation13 + $0x18] sm:$0xf]
    %v1108 = vld [vmem:[#allocation13 + $0x1c] sm:$0xf]
    %v1109 = vld [vmem:[#allocation13 + $0x20] sm:$0xf]
    %v1110 = vld [vmem:[#allocation13 + $0x24] sm:$0xf]
    %v1111 = vld [vmem:[#allocation13 + $0x28] sm:$0xf]
    %v1112 = vld [vmem:[#allocation13 + $0x2c] sm:$0xf]
    %v1113 = vld [vmem:[#allocation13 + $0x30] sm:$0xf]
    %v1114 = vld [vmem:[#allocation13 + $0x34] sm:$0xf]
    %v1115 = vld [vmem:[#allocation13 + $0x38] sm:$0xf]
    %v1116 = vld [vmem:[#allocation13 + $0x3c] sm:$0xf]
    %v1117 = vld [vmem:[%s9] sm:$0x1]
    %v1119 = vperm.slane %v1117, 0
    %v1137 = vunpack.c.l.b16 %v1101
    %v1138 = vunpack.c.l.b16 %v1102
    %v1139 = vunpack.c.l.b16 %v1103
    %v1140 = vunpack.c.l.b16 %v1104
    %v1141 = vunpack.c.l.b16 %v1105
    %v1142 = vunpack.c.l.b16 %v1106
    %v1143 = vunpack.c.l.b16 %v1107
    %v1144 = vunpack.c.l.b16 %v1108
    %v1145 = vunpack.c.l.b16 %v1109
    %v1146 = vunpack.c.l.b16 %v1110
    %v1147 = vunpack.c.l.b16 %v1111
    %v1148 = vunpack.c.l.b16 %v1112
    %v1149 = vunpack.c.l.b16 %v1113
    %v1150 = vunpack.c.l.b16 %v1114
    %v1151 = vunpack.c.l.b16 %v1115
    %v1152 = vunpack.c.l.b16 %v1116
    %v1153 = vpack.c.b16 %v1138, %v1137
    %v1154 = vpack.c.b16 %v1140, %v1139
    %v1155 = vpack.c.b16 %v1142, %v1141
    %v1156 = vpack.c.b16 %v1144, %v1143
    %v1157 = vpack.c.b16 %v1146, %v1145
    %v1158 = vpack.c.b16 %v1148, %v1147
    %v1159 = vpack.c.b16 %v1150, %v1149
    %v1160 = vpack.c.b16 %v1152, %v1151
    %1169 = vmatpush.bf16.msra.mxu0 %v1160
    %1170 = vmatpush.bf16.msra.mxu0 %v1159
    %1171 = vmatpush.bf16.msra.mxu0 %v1158
    %1172 = vmatpush.bf16.msra.mxu0 %v1157
    %1173 = vmatpush.bf16.msra.mxu0 %v1156
    %1174 = vmatpush.bf16.msra.mxu0 %v1155
    %1175 = vmatpush.bf16.msra.mxu0 %v1154
    %1176 = vmatpush.bf16.msra.mxu0 %v1153
    %1177 = vmatmul.bf16.gmra.mxu0 %v1100
    %v1178 = vpop.f32.mrf.mxu0
    %v1179 = vadd.f32 %v1119, %v1178
    %v1180 = vpop.f32.mrf.mxu0
    %1181 = vdwg.mxu0
    %1182 = vst [vmem:[#allocation14] sm:$0xff] %v1179
    // Predicated region
    $region70: #{tpu_custom_call.1} parent=1 // pred_check
      _
    $region71: #{tpu_custom_call.1} parent=1 // pred_check_branch
      %1184 = sbr.rel (0) target = $region73
    $region72: #{tpu_custom_call.1} parent=1 // pred_region
      %1186 = vsyncadd [#allocation4], 0
      %s1188 = sshll.u32 [#allocation14], 4
      %s1189 = int_to_ptr.vmem [resolvable:$true] %s1188
      %s1190 = sshll.u32 %s10, 4
      %s1191 = int_to_ptr.hbm [resolvable:$true] %s1190
      %1193 = dma.vmem_to_hbm [thread:$0]  %s1189, 128, %s1191, [#allocation4]
    $region73: #{tpu_custom_call.1} parent=1 // pred_fallthru
      _
    // Predicated region
    $region74: #{tpu_custom_call.1} parent=1 // pred_check
      _
    $region75: #{tpu_custom_call.1} parent=1 // pred_check_branch
      %1195 = sbr.rel (0) target = $region77
    $region76: #{tpu_custom_call.1} parent=1 // pred_region
      %1197 = dma.done [#allocation4], 128
    $region77: #{tpu_custom_call.1} parent=1 // pred_fallthru
      _
    %1198 = vsyncpa [#allocation3], 1
    %1199 = vsyncpa [#allocation6], 1
    %1200 = vsyncpa [#allocation9], 1
    %1201 = vsyncpa [#allocation12], 1
    %1202 = vsyncpa [#allocation4], 1

</llo_original>
